<compile_context>
chip_gen: v7x
topology: tpu7x:2x2x1
jax: 0.10.0
libtpu: 0.0.40
codegen_flags: <defaults>
</compile_context>

<pallas_src>
import jax
import jax.numpy as jnp
from jax import lax
from jax.experimental import pallas as pl
from jax.experimental.pallas import tpu as pltpu

VOCAB_SIZE = 32
EMBED_SIZE = 16
CONTEXT_SIZE = 8          # context * embed = 128 (lane-friendly)
HIDDEN = 120              # fixed by the PyTorch module

CE = CONTEXT_SIZE * EMBED_SIZE      # 128 : flattened embedding width (one vreg row)
CV = CONTEXT_SIZE * VOCAB_SIZE      # 256 : one-hot width (context-position * vocab)
HP = 128                            # hidden padded 120 -> 128
VP = 128                            # vocab  padded  32 -> 128 (lane-dense output)
NEG = -1e30                         # pad-logit bias (exp underflows to 0 in log_softmax)


def ngram_kernel(off_ref, embblk_ref, w1_ref, b1_ref, w2_ref, b2_ref, out_ref):
    tb = off_ref.shape[0]
    off = off_ref[...]                                       # (TB, C) int32, values in [0, C*V)
    lane = lax.broadcasted_iota(jnp.int32, (tb, CV), 1)      # (TB, 256)

    # One-hot gather matrix: onehot[b, i*V + w] = 1 iff context word i of row b is w.
    onehot = jnp.zeros((tb, CV), jnp.float32)
    for i in range(CONTEXT_SIZE):                            # 8 cheap VPU selects (static unroll)
        onehot = jnp.where(lane == off[:, i:i + 1], 1.0, onehot)

    # Embedding lookup + flatten as a single MXU dot against block-diag(emb): (TB,256)@(256,128)
    v = jnp.dot(onehot, embblk_ref[...], preferred_element_type=jnp.float32)

    # linear1 + ReLU, hidden padded to 128 lanes: one (TB,128)@(128,128) dot
    h = jnp.maximum(
        jnp.dot(v, w1_ref[...], preferred_element_type=jnp.float32) + b1_ref[...], 0.0)

    # linear2, vocab padded to 128 lanes (padded lanes carry NEG bias): (TB,128)@(128,128)
    logits = jnp.dot(h, w2_ref[...], preferred_element_type=jnp.float32) + b2_ref[...]

    # row-wise log_softmax; padded vocab lanes contribute exp(NEG - m) == 0
    m = jnp.max(logits, axis=-1, keepdims=True)
    s = logits - m
    lse = jnp.log(jnp.sum(jnp.exp(s), axis=-1, keepdims=True))
    out_ref[...] = s - lse


def ngram_forward(x, emb, w1, b1, w2, b2):
    """x: (CONTEXT_SIZE,) or (B, CONTEXT_SIZE) int32 word indices.
    Returns (1, vocab) or (B, vocab) log-probabilities (row b == module.forward(x[b]))."""
    xb = x.reshape(1, -1) if x.ndim == 1 else x
    B = xb.shape[0]

    # Clamp untrusted indices (no runtime OOB check on VMEM / one-hot lanes).
    xb = jnp.clip(xb.astype(jnp.int32), 0, VOCAB_SIZE - 1)

    # Lane offsets: context word i of each row maps to one-hot lane i*V + idx.
    off = xb + (jnp.arange(CONTEXT_SIZE, dtype=jnp.int32) * VOCAB_SIZE)[None, :]

    # Layout plumbing (no model math): block-diag embedding + padded / transposed weights.
    emb_blk = jnp.kron(jnp.eye(CONTEXT_SIZE, dtype=jnp.float32), emb)          # (256, 128)
    w1p = jnp.zeros((CE, HP), jnp.float32).at[:, :HIDDEN].set(w1.T)            # (128, 128)
    b1p = jnp.zeros((1, HP), jnp.float32).at[0, :HIDDEN].set(b1)               # (1, 128)
    w2p = jnp.zeros((HP, VP), jnp.float32).at[:HIDDEN, :VOCAB_SIZE].set(w2.T)  # (128, 128)
    b2p = jnp.full((1, VP), NEG, jnp.float32).at[0, :VOCAB_SIZE].set(b2)       # (1, 128)

    # Batch tiling: pad B up to a tile multiple, grid over batch tiles.
    tile_b = min(256, ((B + 7) // 8) * 8)
    b_pad = ((B + tile_b - 1) // tile_b) * tile_b
    off = jnp.pad(off, ((0, b_pad - B), (0, 0)))   # padded rows are valid but sliced off below

    out = pl.pallas_call(
        ngram_kernel,
        out_shape=jax.ShapeDtypeStruct((b_pad, VP), jnp.float32),
        grid=(b_pad // tile_b,),
        in_specs=[
            pl.BlockSpec((tile_b, CONTEXT_SIZE), lambda b: (b, 0)),   # index offsets
            pl.BlockSpec((CV, CE), lambda b: (0, 0)),                 # block-diag embedding
            pl.BlockSpec((CE, HP), lambda b: (0, 0)),                 # W1 (padded, transposed)
            pl.BlockSpec((1, HP), lambda b: (0, 0)),                  # b1 (padded)
            pl.BlockSpec((HP, VP), lambda b: (0, 0)),                 # W2 (padded, transposed)
            pl.BlockSpec((1, VP), lambda b: (0, 0)),                  # b2 (padded with NEG)
        ],
        out_specs=pl.BlockSpec((tile_b, VP), lambda b: (b, 0)),
        compiler_params=pltpu.CompilerParams(
            dimension_semantics=("parallel",)),      # shard batch tiles across v7x's 2 TCs
    )(off, emb_blk, w1p, b1p, w2p, b2p)

    return out[:B, :VOCAB_SIZE]


def ngram_reference(x, emb, w1, b1, w2, b2):
    xb = x.reshape(1, -1) if x.ndim == 1 else x
    v = emb[xb].reshape(xb.shape[0], -1)
    h = jnp.maximum(v @ w1.T + b1, 0.0)
    logits = h @ w2.T + b2
    return jax.nn.log_softmax(logits, axis=-1)


if __name__ == "__main__":
    key = jax.random.PRNGKey(0)
    k_emb, k_w1, k_b1, k_w2, k_b2, k_x1, k_xb = jax.random.split(key, 7)

    # Deterministic synthetic parameters (shapes from the module's __init__).
    emb = jax.random.normal(k_emb, (VOCAB_SIZE, EMBED_SIZE), jnp.float32)
    w1 = jax.random.normal(k_w1, (HIDDEN, CONTEXT_SIZE * EMBED_SIZE), jnp.float32) * 0.1
    b1 = jax.random.normal(k_b1, (HIDDEN,), jnp.float32) * 0.1
    w2 = jax.random.normal(k_w2, (VOCAB_SIZE, HIDDEN), jnp.float32) * 0.1
    b2 = jax.random.normal(k_b2, (VOCAB_SIZE,), jnp.float32) * 0.1

    # 1) Exact module semantics: one sequence of `context_size` indices -> (1, vocab).
    x_single = jax.random.randint(k_x1, (CONTEXT_SIZE,), 0, VOCAB_SIZE, jnp.int32)
    out_single = jax.block_until_ready(ngram_forward(x_single, emb, w1, b1, w2, b2))
    ref_single = ngram_reference(x_single, emb, w1, b1, w2, b2)
    assert out_single.shape == (1, VOCAB_SIZE)
    assert jnp.allclose(out_single, ref_single, atol=1e-4, rtol=1e-4)

    # 2) Batched contexts (the perf path: grid over batch tiles, parallel across TCs).
    B = 64
    x_batch = jax.random.randint(k_xb, (B, CONTEXT_SIZE), 0, VOCAB_SIZE, jnp.int32)
    out_batch = jax.block_until_ready(ngram_forward(x_batch, emb, w1, b1, w2, b2))
    ref_batch = ngram_reference(x_batch, emb, w1, b1, w2, b2)
    assert out_batch.shape == (B, VOCAB_SIZE)
    assert jnp.allclose(out_batch, ref_batch, atol=1e-4, rtol=1e-4)

    print("KERNEL_OK")
</pallas_src>

<mosaic_0001>
module attributes {stable_mosaic.version = 11 : i64} {
  func.func @ngram_kernel(%arg0: i32, %arg1: memref<8x8xi32, #tpu.memory_space<vmem>>, %arg2: memref<256x128xf32, #tpu.memory_space<vmem>>, %arg3: memref<128x128xf32, #tpu.memory_space<vmem>>, %arg4: memref<1x128xf32, #tpu.memory_space<vmem>>, %arg5: memref<128x128xf32, #tpu.memory_space<vmem>>, %arg6: memref<1x128xf32, #tpu.memory_space<vmem>>, %arg7: memref<8x128xf32, #tpu.memory_space<vmem>>) attributes {dimension_semantics = [#tpu.dimension_semantics<parallel>], iteration_bounds = array<i64: 1>, scalar_prefetch = 0 : i64, scratch_operands = 0 : i64, tpu.core_type = #tpu.core_type<tc>, window_params = [{transform_indices = @transform_0, window_bounds = array<i64: 8, 8>}, {pipeline_mode = #tpu.pipeline_mode<synchronous>, transform_indices = @transform_1, window_bounds = array<i64: 256, 128>}, {pipeline_mode = #tpu.pipeline_mode<synchronous>, transform_indices = @transform_2, window_bounds = array<i64: 128, 128>}, {pipeline_mode = #tpu.pipeline_mode<synchronous>, transform_indices = @transform_3, window_bounds = array<i64: 1, 128>}, {pipeline_mode = #tpu.pipeline_mode<synchronous>, transform_indices = @transform_4, window_bounds = array<i64: 128, 128>}, {pipeline_mode = #tpu.pipeline_mode<synchronous>, transform_indices = @transform_5, window_bounds = array<i64: 1, 128>}, {transform_indices = @transform_6, window_bounds = array<i64: 8, 128>}]} {
    %c0 = arith.constant 0 : index
    %c0_0 = arith.constant 0 : index
    %0 = vector.load %arg1[%c0, %c0_0] : memref<8x8xi32, #tpu.memory_space<vmem>>, vector<8x8xi32>
    %1 = tpu.iota {dimensions = array<i32: 1>} : vector<8x256xi32>
    %cst = arith.constant 0.000000e+00 : f32
    %2 = vector.broadcast %cst : f32 to vector<8x256xf32>
    %3 = vector.extract_strided_slice %0 {offsets = [0, 0], sizes = [8, 1], strides = [1, 1]} : vector<8x8xi32> to vector<8x1xi32>
    %4 = vector.broadcast %3 : vector<8x1xi32> to vector<8x256xi32>
    %5 = arith.cmpi eq, %1, %4 : vector<8x256xi32>
    %cst_1 = arith.constant 1.000000e+00 : f32
    %6 = vector.broadcast %cst_1 : f32 to vector<8x256xf32>
    %7 = arith.select %5, %6, %2 : vector<8x256xi1>, vector<8x256xf32>
    %8 = vector.extract_strided_slice %0 {offsets = [0, 1], sizes = [8, 1], strides = [1, 1]} : vector<8x8xi32> to vector<8x1xi32>
    %9 = vector.broadcast %8 : vector<8x1xi32> to vector<8x256xi32>
    %10 = arith.cmpi eq, %1, %9 : vector<8x256xi32>
    %cst_2 = arith.constant 1.000000e+00 : f32
    %11 = vector.broadcast %cst_2 : f32 to vector<8x256xf32>
    %12 = arith.select %10, %11, %7 : vector<8x256xi1>, vector<8x256xf32>
    %13 = vector.extract_strided_slice %0 {offsets = [0, 2], sizes = [8, 1], strides = [1, 1]} : vector<8x8xi32> to vector<8x1xi32>
    %14 = vector.broadcast %13 : vector<8x1xi32> to vector<8x256xi32>
    %15 = arith.cmpi eq, %1, %14 : vector<8x256xi32>
    %cst_3 = arith.constant 1.000000e+00 : f32
    %16 = vector.broadcast %cst_3 : f32 to vector<8x256xf32>
    %17 = arith.select %15, %16, %12 : vector<8x256xi1>, vector<8x256xf32>
    %18 = vector.extract_strided_slice %0 {offsets = [0, 3], sizes = [8, 1], strides = [1, 1]} : vector<8x8xi32> to vector<8x1xi32>
    %19 = vector.broadcast %18 : vector<8x1xi32> to vector<8x256xi32>
    %20 = arith.cmpi eq, %1, %19 : vector<8x256xi32>
    %cst_4 = arith.constant 1.000000e+00 : f32
    %21 = vector.broadcast %cst_4 : f32 to vector<8x256xf32>
    %22 = arith.select %20, %21, %17 : vector<8x256xi1>, vector<8x256xf32>
    %23 = vector.extract_strided_slice %0 {offsets = [0, 4], sizes = [8, 1], strides = [1, 1]} : vector<8x8xi32> to vector<8x1xi32>
    %24 = vector.broadcast %23 : vector<8x1xi32> to vector<8x256xi32>
    %25 = arith.cmpi eq, %1, %24 : vector<8x256xi32>
    %cst_5 = arith.constant 1.000000e+00 : f32
    %26 = vector.broadcast %cst_5 : f32 to vector<8x256xf32>
    %27 = arith.select %25, %26, %22 : vector<8x256xi1>, vector<8x256xf32>
    %28 = vector.extract_strided_slice %0 {offsets = [0, 5], sizes = [8, 1], strides = [1, 1]} : vector<8x8xi32> to vector<8x1xi32>
    %29 = vector.broadcast %28 : vector<8x1xi32> to vector<8x256xi32>
    %30 = arith.cmpi eq, %1, %29 : vector<8x256xi32>
    %cst_6 = arith.constant 1.000000e+00 : f32
    %31 = vector.broadcast %cst_6 : f32 to vector<8x256xf32>
    %32 = arith.select %30, %31, %27 : vector<8x256xi1>, vector<8x256xf32>
    %33 = vector.extract_strided_slice %0 {offsets = [0, 6], sizes = [8, 1], strides = [1, 1]} : vector<8x8xi32> to vector<8x1xi32>
    %34 = vector.broadcast %33 : vector<8x1xi32> to vector<8x256xi32>
    %35 = arith.cmpi eq, %1, %34 : vector<8x256xi32>
    %cst_7 = arith.constant 1.000000e+00 : f32
    %36 = vector.broadcast %cst_7 : f32 to vector<8x256xf32>
    %37 = arith.select %35, %36, %32 : vector<8x256xi1>, vector<8x256xf32>
    %38 = vector.extract_strided_slice %0 {offsets = [0, 7], sizes = [8, 1], strides = [1, 1]} : vector<8x8xi32> to vector<8x1xi32>
    %39 = vector.broadcast %38 : vector<8x1xi32> to vector<8x256xi32>
    %40 = arith.cmpi eq, %1, %39 : vector<8x256xi32>
    %cst_8 = arith.constant 1.000000e+00 : f32
    %41 = vector.broadcast %cst_8 : f32 to vector<8x256xf32>
    %42 = arith.select %40, %41, %37 : vector<8x256xi1>, vector<8x256xf32>
    %c0_9 = arith.constant 0 : index
    %c0_10 = arith.constant 0 : index
    %43 = vector.load %arg2[%c0_9, %c0_10] : memref<256x128xf32, #tpu.memory_space<vmem>>, vector<256x128xf32>
    %cst_11 = arith.constant dense<0.000000e+00> : vector<8x128xf32>
    %44 = tpu.matmul %42, %43, %cst_11 {dimension_numbers = #tpu.dot_dimension_numbers<[1], [0], [0], [1], [0, 0, 1, 1], [], []>} : vector<8x256xf32>, vector<256x128xf32>, vector<8x128xf32> -> vector<8x128xf32>
    %c0_12 = arith.constant 0 : index
    %c0_13 = arith.constant 0 : index
    %45 = vector.load %arg3[%c0_12, %c0_13] : memref<128x128xf32, #tpu.memory_space<vmem>>, vector<128x128xf32>
    %cst_14 = arith.constant dense<0.000000e+00> : vector<8x128xf32>
    %46 = tpu.matmul %44, %45, %cst_14 {dimension_numbers = #tpu.dot_dimension_numbers<[1], [0], [0], [1], [0, 0, 1, 1], [], []>} : vector<8x128xf32>, vector<128x128xf32>, vector<8x128xf32> -> vector<8x128xf32>
    %c0_15 = arith.constant 0 : index
    %c0_16 = arith.constant 0 : index
    %47 = vector.load %arg4[%c0_15, %c0_16] : memref<1x128xf32, #tpu.memory_space<vmem>>, vector<1x128xf32>
    %48 = vector.broadcast %47 : vector<1x128xf32> to vector<8x128xf32>
    %49 = arith.addf %46, %48 : vector<8x128xf32>
    %cst_17 = arith.constant 0.000000e+00 : f32
    %50 = vector.broadcast %cst_17 : f32 to vector<8x128xf32>
    %51 = arith.maximumf %49, %50 : vector<8x128xf32>
    %c0_18 = arith.constant 0 : index
    %c0_19 = arith.constant 0 : index
    %52 = vector.load %arg5[%c0_18, %c0_19] : memref<128x128xf32, #tpu.memory_space<vmem>>, vector<128x128xf32>
    %cst_20 = arith.constant dense<0.000000e+00> : vector<8x128xf32>
    %53 = tpu.matmul %51, %52, %cst_20 {dimension_numbers = #tpu.dot_dimension_numbers<[1], [0], [0], [1], [0, 0, 1, 1], [], []>} : vector<8x128xf32>, vector<128x128xf32>, vector<8x128xf32> -> vector<8x128xf32>
    %c0_21 = arith.constant 0 : index
    %c0_22 = arith.constant 0 : index
    %54 = vector.load %arg6[%c0_21, %c0_22] : memref<1x128xf32, #tpu.memory_space<vmem>>, vector<1x128xf32>
    %55 = vector.broadcast %54 : vector<1x128xf32> to vector<8x128xf32>
    %56 = arith.addf %53, %55 : vector<8x128xf32>
    %cst_23 = arith.constant dense<0xFF800000> : vector<8xf32>
    %57 = vector.multi_reduction <maximumf>, %56, %cst_23 [1] : vector<8x128xf32> to vector<8xf32>
    %58 = vector.shape_cast %57 : vector<8xf32> to vector<8x1xf32>
    %59 = vector.broadcast %58 : vector<8x1xf32> to vector<8x128xf32>
    %60 = arith.subf %56, %59 : vector<8x128xf32>
    %61 = math.exp %60 : vector<8x128xf32>
    %cst_24 = arith.constant dense<0.000000e+00> : vector<8xf32>
    %62 = vector.multi_reduction <add>, %61, %cst_24 [1] : vector<8x128xf32> to vector<8xf32>
    %63 = vector.shape_cast %62 : vector<8xf32> to vector<8x1xf32>
    %64 = math.log %63 : vector<8x1xf32>
    %65 = vector.broadcast %64 : vector<8x1xf32> to vector<8x128xf32>
    %66 = arith.subf %60, %65 : vector<8x128xf32>
    %c0_25 = arith.constant 0 : index
    %c0_26 = arith.constant 0 : index
    %67 = vector.load %arg7[%c0_25, %c0_26] : memref<8x128xf32, #tpu.memory_space<vmem>>, vector<8x128xf32>
    tpu.vector_store %arg7[%c0_25, %c0_26], %66 {strides = array<i32>} : memref<8x128xf32, #tpu.memory_space<vmem>>, vector<8x128xf32>,
    return
  }
  func.func @transform_0(%arg0: i32) -> (i32, i32) {
    %c0_i32 = arith.constant 0 : i32
    %c0_i32_0 = arith.constant 0 : i32
    return %arg0, %c0_i32 : i32, i32
  }
  func.func @transform_1(%arg0: i32) -> (i32, i32) {
    %c0_i32 = arith.constant 0 : i32
    %c0_i32_0 = arith.constant 0 : i32
    %c0_i32_1 = arith.constant 0 : i32
    return %c0_i32, %c0_i32_0 : i32, i32
  }
  func.func @transform_2(%arg0: i32) -> (i32, i32) {
    %c0_i32 = arith.constant 0 : i32
    %c0_i32_0 = arith.constant 0 : i32
    %c0_i32_1 = arith.constant 0 : i32
    return %c0_i32, %c0_i32_0 : i32, i32
  }
  func.func @transform_3(%arg0: i32) -> (i32, i32) {
    %c0_i32 = arith.constant 0 : i32
    %c0_i32_0 = arith.constant 0 : i32
    %c0_i32_1 = arith.constant 0 : i32
    return %c0_i32, %c0_i32_0 : i32, i32
  }
  func.func @transform_4(%arg0: i32) -> (i32, i32) {
    %c0_i32 = arith.constant 0 : i32
    %c0_i32_0 = arith.constant 0 : i32
    %c0_i32_1 = arith.constant 0 : i32
    return %c0_i32, %c0_i32_0 : i32, i32
  }
  func.func @transform_5(%arg0: i32) -> (i32, i32) {
    %c0_i32 = arith.constant 0 : i32
    %c0_i32_0 = arith.constant 0 : i32
    %c0_i32_1 = arith.constant 0 : i32
    return %c0_i32, %c0_i32_0 : i32, i32
  }
  func.func @transform_6(%arg0: i32) -> (i32, i32) {
    %c0_i32 = arith.constant 0 : i32
    %c0_i32_0 = arith.constant 0 : i32
    return %arg0, %c0_i32 : i32, i32
  }
}

</mosaic_0001>

<llo_original>
// kernel: tpu_custom_call.1
$region0: #{tpu_custom_call.1}
  #allocation0 [shape = 'u32[]', space=smem, size = 0x4, offset = 0x4, fixed_abs, tag = 'smem constant byte address 0x4 - core index']
  #allocation1 [shape = 'u32[144,128]{1,0:T(1,128)}', space=vmem, size = 0x12000, scoped, tag = 'internal scratch']
  %s0 = inlined_call_operand.hbm [shape: s32[8,8], index: 0, kind: input, shape index: {}]
  %s1 = inlined_call_operand.hbm [shape: f32[256,128], index: 1, kind: input, shape index: {}]
  %s2 = inlined_call_operand.hbm [shape: f32[128,128], index: 2, kind: input, shape index: {}]
  %s3 = inlined_call_operand.vmem [shape: f32[1,128], index: 3, kind: input, shape index: {}]
  %s4 = inlined_call_operand.hbm [shape: f32[128,128], index: 4, kind: input, shape index: {}]
  %s5 = inlined_call_operand.vmem [shape: f32[1,128], index: 5, kind: input, shape index: {}]
  %s6 = inlined_call_operand.hbm [shape: f32[8,128], index: 6, kind: output, shape index: {}]
  %s7 = sld [smem:[#allocation0]]
  $region50: #{tpu_custom_call.1} parent=0
    _
  %s9 = ssub.s32 1, %s7
  %s10 = scalar_select 0, %s9, %s7
  $region1: #{tpu_custom_call.1} parent=0
    #allocation2 [shape = 'u8[4096]{0}', space=vmem, size = 0x1000, scoped, tag = 'input window, operand 0, single buffered']
    #allocation3 [shape = 's32[1]{0}', space=sflag, size = 0x4, scoped, tag = 'scoped memory for tpu_custom_call.1']
    #allocation4 [shape = 's32[1]{0}', space=sflag, size = 0x4, scoped, tag = 'scoped memory for tpu_custom_call.1']
    #allocation5 [shape = 'u8[131072]{0}', space=vmem, size = 0x20000, scoped, tag = 'input window, operand 1, single buffered']
    #allocation6 [shape = 's32[1]{0}', space=sflag, size = 0x4, scoped, tag = 'scoped memory for tpu_custom_call.1']
    #allocation7 [shape = 'u8[65536]{0}', space=vmem, size = 0x10000, scoped, tag = 'input window, operand 2, single buffered']
    #allocation8 [shape = 'u8[65536]{0}', space=vmem, size = 0x10000, scoped, tag = 'input window, operand 4, single buffered']
    #allocation9 [shape = 's32[1]{0}', space=sflag, size = 0x4, scoped, tag = 'scoped memory for tpu_custom_call.1']
    #allocation10 [shape = 'u8[4096]{0}', space=vmem, size = 0x1000, scoped, tag = 'output window, operand 0, single buffered']
    %11 = vsyncpa [#allocation3], 0
    %12 = vsyncpa [#allocation6], 0
    %13 = vsyncpa [#allocation9], 0
    %14 = vsyncpa [#allocation4], 0
    // Predicated region
    $region2: #{tpu_custom_call.1} parent=1 // pred_check
      _
    $region3: #{tpu_custom_call.1} parent=1 // pred_check_branch
      %16 = sbr.rel (0) target = $region5
    $region4: #{tpu_custom_call.1} parent=1 // pred_region
      %s18 = ssub.s32 128, 128
      %19 = vsyncadd [#allocation3], %s18
      %s21 = sshll.u32 [#allocation2], 4
      %s22 = int_to_ptr.vmem [resolvable:$true] %s21
      %24 = dma.hbm_to_vmem [thread:$0]  %s0, 128, %s22, [#allocation3]
    $region5: #{tpu_custom_call.1} parent=1 // pred_fallthru
      _
    // Predicated region
    $region6: #{tpu_custom_call.1} parent=1 // pred_check
      _
    $region7: #{tpu_custom_call.1} parent=1 // pred_check_branch
      %26 = sbr.rel (0) target = $region9
    $region8: #{tpu_custom_call.1} parent=1 // pred_region
      %s28 = ssub.s32 4096, 4096
      %29 = vsyncadd [#allocation6], %s28
      %s30 = sshll.u32 [#allocation5], 4
      %s31 = int_to_ptr.vmem [resolvable:$true] %s30
      %36 = dma.hbm_to_vmem [thread:$0]  %s1, 4096, %s31, [#allocation6], 128, 128, 8
    $region9: #{tpu_custom_call.1} parent=1 // pred_fallthru
      _
    // Predicated region
    $region10: #{tpu_custom_call.1} parent=1 // pred_check
      _
    $region11: #{tpu_custom_call.1} parent=1 // pred_check_branch
      %38 = sbr.rel (0) target = $region13
    $region12: #{tpu_custom_call.1} parent=1 // pred_region
      %s40 = ssub.s32 2048, 2048
      %41 = vsyncadd [#allocation6], %s40
      %s42 = sshll.u32 [#allocation7], 4
      %s43 = int_to_ptr.vmem [resolvable:$true] %s42
      %48 = dma.hbm_to_vmem [thread:$0]  %s2, 2048, %s43, [#allocation6], 128, 128, 8
    $region13: #{tpu_custom_call.1} parent=1 // pred_fallthru
      _
    // Predicated region
    $region14: #{tpu_custom_call.1} parent=1 // pred_check
      _
    $region15: #{tpu_custom_call.1} parent=1 // pred_check_branch
      %50 = sbr.rel (0) target = $region17
    $region16: #{tpu_custom_call.1} parent=1 // pred_region
      _
    $region17: #{tpu_custom_call.1} parent=1 // pred_fallthru
      _
    // Predicated region
    $region18: #{tpu_custom_call.1} parent=1 // pred_check
      _
    $region19: #{tpu_custom_call.1} parent=1 // pred_check_branch
      %52 = sbr.rel (0) target = $region21
    $region20: #{tpu_custom_call.1} parent=1 // pred_region
      %s54 = ssub.s32 2048, 2048
      %55 = vsyncadd [#allocation9], %s54
      %s56 = sshll.u32 [#allocation8], 4
      %s57 = int_to_ptr.vmem [resolvable:$true] %s56
      %62 = dma.hbm_to_vmem [thread:$0]  %s4, 2048, %s57, [#allocation9], 128, 128, 8
    $region21: #{tpu_custom_call.1} parent=1 // pred_fallthru
      _
    // Predicated region
    $region22: #{tpu_custom_call.1} parent=1 // pred_check
      _
    $region23: #{tpu_custom_call.1} parent=1 // pred_check_branch
      %64 = sbr.rel (0) target = $region25
    $region24: #{tpu_custom_call.1} parent=1 // pred_region
      _
    $region25: #{tpu_custom_call.1} parent=1 // pred_fallthru
      _
    // Predicated region
    $region26: #{tpu_custom_call.1} parent=1 // pred_check
      _
    $region27: #{tpu_custom_call.1} parent=1 // pred_check_branch
      %66 = sbr.rel (0) target = $region29
    $region28: #{tpu_custom_call.1} parent=1 // pred_region
      %67 = dma.done [#allocation3], 128
    $region29: #{tpu_custom_call.1} parent=1 // pred_fallthru
      _
    // Predicated region
    $region30: #{tpu_custom_call.1} parent=1 // pred_check
      _
    $region31: #{tpu_custom_call.1} parent=1 // pred_check_branch
      %69 = sbr.rel (0) target = $region33
    $region32: #{tpu_custom_call.1} parent=1 // pred_region
      %70 = dma.done [#allocation6], 4096
    $region33: #{tpu_custom_call.1} parent=1 // pred_fallthru
      _
    // Predicated region
    $region34: #{tpu_custom_call.1} parent=1 // pred_check
      _
    $region35: #{tpu_custom_call.1} parent=1 // pred_check_branch
      %72 = sbr.rel (0) target = $region37
    $region36: #{tpu_custom_call.1} parent=1 // pred_region
      %73 = dma.done [#allocation6], 2048
    $region37: #{tpu_custom_call.1} parent=1 // pred_fallthru
      _
    // Predicated region
    $region38: #{tpu_custom_call.1} parent=1 // pred_check
      _
    $region39: #{tpu_custom_call.1} parent=1 // pred_check_branch
      %75 = sbr.rel (0) target = $region41
    $region40: #{tpu_custom_call.1} parent=1 // pred_region
      %76 = dma.done [#allocation9], 2048
    $region41: #{tpu_custom_call.1} parent=1 // pred_fallthru
      _
    %v77 = vld [vmem:[#allocation2] sm:$0xff]
    %v78 = vlaneseq
    %v79 = vand.u32 %v78, 127
    %v80 = vadd.s32 %v79, 128
    %81 = vset.pattern.permute.xlu0 0
    %82 = vperm.xlu0 %81, %v77
    %v83 = vpop.permute.xlu0 %82
    %vm84 = vcmp.eq.s32.totalorder %v79, %v83
    %vm85 = vcmp.eq.s32.totalorder %v80, %v83
    %v86 = vsel %vm84, 1.0, 0.0
    %v87 = vsel %vm85, 1.0, 0.0
    %88 = vset.pattern.permute.xlu0 1
    %89 = vperm.xlu0 %88, %v77
    %v90 = vpop.permute.xlu0 %89
    %vm91 = vcmp.eq.s32.totalorder %v79, %v90
    %vm92 = vcmp.eq.s32.totalorder %v80, %v90
    %v93 = vsel %vm91, 1.0, %v86
    %v94 = vsel %vm92, 1.0, %v87
    %95 = vset.pattern.permute.xlu0 2
    %96 = vperm.xlu0 %95, %v77
    %v97 = vpop.permute.xlu0 %96
    %vm98 = vcmp.eq.s32.totalorder %v79, %v97
    %vm99 = vcmp.eq.s32.totalorder %v80, %v97
    %v100 = vsel %vm98, 1.0, %v93
    %v101 = vsel %vm99, 1.0, %v94
    %102 = vset.pattern.permute.xlu0 3
    %103 = vperm.xlu0 %102, %v77
    %v104 = vpop.permute.xlu0 %103
    %vm105 = vcmp.eq.s32.totalorder %v79, %v104
    %vm106 = vcmp.eq.s32.totalorder %v80, %v104
    %v107 = vsel %vm105, 1.0, %v100
    %v108 = vsel %vm106, 1.0, %v101
    %109 = vset.pattern.permute.xlu0 4
    %110 = vperm.xlu0 %109, %v77
    %v111 = vpop.permute.xlu0 %110
    %vm112 = vcmp.eq.s32.totalorder %v79, %v111
    %vm113 = vcmp.eq.s32.totalorder %v80, %v111
    %v114 = vsel %vm112, 1.0, %v107
    %v115 = vsel %vm113, 1.0, %v108
    %116 = vset.pattern.permute.xlu0 5
    %117 = vperm.xlu0 %116, %v77
    %v118 = vpop.permute.xlu0 %117
    %vm119 = vcmp.eq.s32.totalorder %v79, %v118
    %vm120 = vcmp.eq.s32.totalorder %v80, %v118
    %v121 = vsel %vm119, 1.0, %v114
    %v122 = vsel %vm120, 1.0, %v115
    %123 = vset.pattern.permute.xlu0 6
    %124 = vperm.xlu0 %123, %v77
    %v125 = vpop.permute.xlu0 %124
    %vm126 = vcmp.eq.s32.totalorder %v79, %v125
    %vm127 = vcmp.eq.s32.totalorder %v80, %v125
    %v128 = vsel %vm126, 1.0, %v121
    %v129 = vsel %vm127, 1.0, %v122
    %130 = vset.pattern.permute.xlu0 7
    %131 = vperm.xlu0 %130, %v77
    %v132 = vpop.permute.xlu0 %131
    %vm133 = vcmp.eq.s32.totalorder %v79, %v132
    %vm134 = vcmp.eq.s32.totalorder %v80, %v132
    %v135 = vsel %vm133, 1.0, %v128
    %v136 = vsel %vm134, 1.0, %v129
    %v137 = vld [vmem:[#allocation5] sm:$0xff]
    %v138 = vld [vmem:[#allocation5 + $0x8] sm:$0xff]
    %v139 = vld [vmem:[#allocation5 + $0x10] sm:$0xff]
    %v140 = vld [vmem:[#allocation5 + $0x18] sm:$0xff]
    %v141 = vld [vmem:[#allocation5 + $0x20] sm:$0xff]
    %v142 = vld [vmem:[#allocation5 + $0x28] sm:$0xff]
    %v143 = vld [vmem:[#allocation5 + $0x30] sm:$0xff]
    %v144 = vld [vmem:[#allocation5 + $0x38] sm:$0xff]
    %v145 = vld [vmem:[#allocation5 + $0x40] sm:$0xff]
    %v146 = vld [vmem:[#allocation5 + $0x48] sm:$0xff]
    %v147 = vld [vmem:[#allocation5 + $0x50] sm:$0xff]
    %v148 = vld [vmem:[#allocation5 + $0x58] sm:$0xff]
    %v149 = vld [vmem:[#allocation5 + $0x60] sm:$0xff]
    %v150 = vld [vmem:[#allocation5 + $0x68] sm:$0xff]
    %v151 = vld [vmem:[#allocation5 + $0x70] sm:$0xff]
    %v152 = vld [vmem:[#allocation5 + $0x78] sm:$0xff]
    %v153 = vld [vmem:[#allocation5 + $0x80] sm:$0xff]
    %v154 = vld [vmem:[#allocation5 + $0x88] sm:$0xff]
    %v155 = vld [vmem:[#allocation5 + $0x90] sm:$0xff]
    %v156 = vld [vmem:[#allocation5 + $0x98] sm:$0xff]
    %v157 = vld [vmem:[#allocation5 + $0xa0] sm:$0xff]
    %v158 = vld [vmem:[#allocation5 + $0xa8] sm:$0xff]
    %v159 = vld [vmem:[#allocation5 + $0xb0] sm:$0xff]
    %v160 = vld [vmem:[#allocation5 + $0xb8] sm:$0xff]
    %v161 = vld [vmem:[#allocation5 + $0xc0] sm:$0xff]
    %v162 = vld [vmem:[#allocation5 + $0xc8] sm:$0xff]
    %v163 = vld [vmem:[#allocation5 + $0xd0] sm:$0xff]
    %v164 = vld [vmem:[#allocation5 + $0xd8] sm:$0xff]
    %v165 = vld [vmem:[#allocation5 + $0xe0] sm:$0xff]
    %v166 = vld [vmem:[#allocation5 + $0xe8] sm:$0xff]
    %v167 = vld [vmem:[#allocation5 + $0xf0] sm:$0xff]
    %v168 = vld [vmem:[#allocation5 + $0xf8] sm:$0xff]
    %169 = vmatprep.subr.mxu0 0.0
    %170 = vmatpush1.msra.mxu0 %v137
    %171 = vmatprep.subr.mxu0 0.0
    %172 = vmatpush1.msra.mxu0 %v138
    %173 = vmatprep.subr.mxu0 0.0
    %174 = vmatpush1.msra.mxu0 %v139
    %175 = vmatprep.subr.mxu0 0.0
    %176 = vmatpush1.msra.mxu0 %v140
    %177 = vmatprep.subr.mxu0 0.0
    %178 = vmatpush1.msra.mxu0 %v141
    %179 = vmatprep.subr.mxu0 0.0
    %180 = vmatpush1.msra.mxu0 %v142
    %181 = vmatprep.subr.mxu0 0.0
    %182 = vmatpush1.msra.mxu0 %v143
    %183 = vmatprep.subr.mxu0 0.0
    %184 = vmatpush1.msra.mxu0 %v144
    %185 = vmatprep.subr.mxu0 0.0
    %186 = vmatpush1.msra.mxu0 %v145
    %187 = vmatprep.subr.mxu0 0.0
    %188 = vmatpush1.msra.mxu0 %v146
    %189 = vmatprep.subr.mxu0 0.0
    %190 = vmatpush1.msra.mxu0 %v147
    %191 = vmatprep.subr.mxu0 0.0
    %192 = vmatpush1.msra.mxu0 %v148
    %193 = vmatprep.subr.mxu0 0.0
    %194 = vmatpush1.msra.mxu0 %v149
    %195 = vmatprep.subr.mxu0 0.0
    %196 = vmatpush1.msra.mxu0 %v150
    %197 = vmatprep.subr.mxu0 0.0
    %198 = vmatpush1.msra.mxu0 %v151
    %199 = vmatprep.subr.mxu0 0.0
    %200 = vmatpush1.msra.mxu0 %v152
    %201 = vmatprep.subr.mxu0 0.0
    %202 = vmatpush1.msra.mxu0 %v153
    %203 = vmatprep.subr.mxu0 0.0
    %204 = vmatpush1.msra.mxu0 %v154
    %205 = vmatprep.subr.mxu0 0.0
    %206 = vmatpush1.msra.mxu0 %v155
    %207 = vmatprep.subr.mxu0 0.0
    %208 = vmatpush1.msra.mxu0 %v156
    %209 = vmatprep.subr.mxu0 0.0
    %210 = vmatpush1.msra.mxu0 %v157
    %211 = vmatprep.subr.mxu0 0.0
    %212 = vmatpush1.msra.mxu0 %v158
    %213 = vmatprep.subr.mxu0 0.0
    %214 = vmatpush1.msra.mxu0 %v159
    %215 = vmatprep.subr.mxu0 0.0
    %216 = vmatpush1.msra.mxu0 %v160
    %217 = vmatprep.subr.mxu0 0.0
    %218 = vmatpush1.msra.mxu0 %v161
    %219 = vmatprep.subr.mxu0 0.0
    %220 = vmatpush1.msra.mxu0 %v162
    %221 = vmatprep.subr.mxu0 0.0
    %222 = vmatpush1.msra.mxu0 %v163
    %223 = vmatprep.subr.mxu0 0.0
    %224 = vmatpush1.msra.mxu0 %v164
    %225 = vmatprep.subr.mxu0 0.0
    %226 = vmatpush1.msra.mxu0 %v165
    %227 = vmatprep.subr.mxu0 0.0
    %228 = vmatpush1.msra.mxu0 %v166
    %229 = vmatprep.subr.mxu0 0.0
    %230 = vmatpush1.msra.mxu0 %v167
    %231 = vmatprep.subr.mxu0 0.0
    %232 = vmatpush1.msra.mxu0 %v168
    %233 = vmatprep.mubr.f32.mxu0 %v136
    %234 = vmatmul.mubr.f32.gmra.mrb[0].mxu0 %v135
    %v235 = vpop.f32.mrb[0].mxu0
    %v236 = vadd.f32 0.0, %v235
    %v237 = vpop.f32.mrb[0].mxu0
    %238 = vdwg.mxu0
    %v239 = vld [vmem:[#allocation7] sm:$0xff]
    %v240 = vld [vmem:[#allocation7 + $0x8] sm:$0xff]
    %v241 = vld [vmem:[#allocation7 + $0x10] sm:$0xff]
    %v242 = vld [vmem:[#allocation7 + $0x18] sm:$0xff]
    %v243 = vld [vmem:[#allocation7 + $0x20] sm:$0xff]
    %v244 = vld [vmem:[#allocation7 + $0x28] sm:$0xff]
    %v245 = vld [vmem:[#allocation7 + $0x30] sm:$0xff]
    %v246 = vld [vmem:[#allocation7 + $0x38] sm:$0xff]
    %v247 = vld [vmem:[#allocation7 + $0x40] sm:$0xff]
    %v248 = vld [vmem:[#allocation7 + $0x48] sm:$0xff]
    %v249 = vld [vmem:[#allocation7 + $0x50] sm:$0xff]
    %v250 = vld [vmem:[#allocation7 + $0x58] sm:$0xff]
    %v251 = vld [vmem:[#allocation7 + $0x60] sm:$0xff]
    %v252 = vld [vmem:[#allocation7 + $0x68] sm:$0xff]
    %v253 = vld [vmem:[#allocation7 + $0x70] sm:$0xff]
    %v254 = vld [vmem:[#allocation7 + $0x78] sm:$0xff]
    %v255 = vld [vmem:[%s3] sm:$0x1]
    %v257 = vlaneseq
    %v258 = vshrl.u32 %v257, 7
    %v259 = vsub.s32 0, %v258
    %v260 = vrot.slane %v255, %v259
    %262 = vmatprep.subr.mxu0 0.0
    %263 = vmatpush1.msra.mxu0 %v239
    %264 = vmatprep.subr.mxu0 0.0
    %265 = vmatpush1.msra.mxu0 %v240
    %266 = vmatprep.subr.mxu0 0.0
    %267 = vmatpush1.msra.mxu0 %v241
    %268 = vmatprep.subr.mxu0 0.0
    %269 = vmatpush1.msra.mxu0 %v242
    %270 = vmatprep.subr.mxu0 0.0
    %271 = vmatpush1.msra.mxu0 %v243
    %272 = vmatprep.subr.mxu0 0.0
    %273 = vmatpush1.msra.mxu0 %v244
    %274 = vmatprep.subr.mxu0 0.0
    %275 = vmatpush1.msra.mxu0 %v245
    %276 = vmatprep.subr.mxu0 0.0
    %277 = vmatpush1.msra.mxu0 %v246
    %278 = vmatprep.subr.mxu0 0.0
    %279 = vmatpush1.msra.mxu0 %v247
    %280 = vmatprep.subr.mxu0 0.0
    %281 = vmatpush1.msra.mxu0 %v248
    %282 = vmatprep.subr.mxu0 0.0
    %283 = vmatpush1.msra.mxu0 %v249
    %284 = vmatprep.subr.mxu0 0.0
    %285 = vmatpush1.msra.mxu0 %v250
    %286 = vmatprep.subr.mxu0 0.0
    %287 = vmatpush1.msra.mxu0 %v251
    %288 = vmatprep.subr.mxu0 0.0
    %289 = vmatpush1.msra.mxu0 %v252
    %290 = vmatprep.subr.mxu0 0.0
    %291 = vmatpush1.msra.mxu0 %v253
    %292 = vmatprep.subr.mxu0 0.0
    %293 = vmatpush1.msra.mxu0 %v254
    %294 = vmatprep.subr.mxu0 0.0
    %295 = vmatpush1.msra.mxu0 0.0
    %296 = vmatprep.subr.mxu0 0.0
    %297 = vmatpush1.msra.mxu0 0.0
    %298 = vmatprep.subr.mxu0 0.0
    %299 = vmatpush1.msra.mxu0 0.0
    %300 = vmatprep.subr.mxu0 0.0
    %301 = vmatpush1.msra.mxu0 0.0
    %302 = vmatprep.subr.mxu0 0.0
    %303 = vmatpush1.msra.mxu0 0.0
    %304 = vmatprep.subr.mxu0 0.0
    %305 = vmatpush1.msra.mxu0 0.0
    %306 = vmatprep.subr.mxu0 0.0
    %307 = vmatpush1.msra.mxu0 0.0
    %308 = vmatprep.subr.mxu0 0.0
    %309 = vmatpush1.msra.mxu0 0.0
    %310 = vmatprep.subr.mxu0 0.0
    %311 = vmatpush1.msra.mxu0 0.0
    %312 = vmatprep.subr.mxu0 0.0
    %313 = vmatpush1.msra.mxu0 0.0
    %314 = vmatprep.subr.mxu0 0.0
    %315 = vmatpush1.msra.mxu0 0.0
    %316 = vmatprep.subr.mxu0 0.0
    %317 = vmatpush1.msra.mxu0 0.0
    %318 = vmatprep.subr.mxu0 0.0
    %319 = vmatpush1.msra.mxu0 0.0
    %320 = vmatprep.subr.mxu0 0.0
    %321 = vmatpush1.msra.mxu0 0.0
    %322 = vmatprep.subr.mxu0 0.0
    %323 = vmatpush1.msra.mxu0 0.0
    %324 = vmatprep.subr.mxu0 0.0
    %325 = vmatpush1.msra.mxu0 0.0
    %326 = vmatprep.mubr.f32.mxu0 0.0
    %327 = vmatmul.mubr.f32.gmra.mrb[0].mxu0 %v236
    %v328 = vpop.f32.mrb[0].mxu0
    %v329 = vadd.f32 %v260, %v328
    %v330 = vpop.f32.mrb[0].mxu0
    %331 = vdwg.mxu0
    %v332 = vmax.f32 %v329, 0.0
    %v333 = vld [vmem:[#allocation8] sm:$0xff]
    %v334 = vld [vmem:[#allocation8 + $0x8] sm:$0xff]
    %v335 = vld [vmem:[#allocation8 + $0x10] sm:$0xff]
    %v336 = vld [vmem:[#allocation8 + $0x18] sm:$0xff]
    %v337 = vld [vmem:[#allocation8 + $0x20] sm:$0xff]
    %v338 = vld [vmem:[#allocation8 + $0x28] sm:$0xff]
    %v339 = vld [vmem:[#allocation8 + $0x30] sm:$0xff]
    %v340 = vld [vmem:[#allocation8 + $0x38] sm:$0xff]
    %v341 = vld [vmem:[#allocation8 + $0x40] sm:$0xff]
    %v342 = vld [vmem:[#allocation8 + $0x48] sm:$0xff]
    %v343 = vld [vmem:[#allocation8 + $0x50] sm:$0xff]
    %v344 = vld [vmem:[#allocation8 + $0x58] sm:$0xff]
    %v345 = vld [vmem:[#allocation8 + $0x60] sm:$0xff]
    %v346 = vld [vmem:[#allocation8 + $0x68] sm:$0xff]
    %v347 = vld [vmem:[#allocation8 + $0x70] sm:$0xff]
    %v348 = vld [vmem:[#allocation8 + $0x78] sm:$0xff]
    %v349 = vld [vmem:[%s5] sm:$0x1]
    %v351 = vlaneseq
    %v352 = vshrl.u32 %v351, 7
    %v353 = vsub.s32 0, %v352
    %v354 = vrot.slane %v349, %v353
    %356 = vmatprep.subr.mxu0 0.0
    %357 = vmatpush1.msra.mxu0 %v333
    %358 = vmatprep.subr.mxu0 0.0
    %359 = vmatpush1.msra.mxu0 %v334
    %360 = vmatprep.subr.mxu0 0.0
    %361 = vmatpush1.msra.mxu0 %v335
    %362 = vmatprep.subr.mxu0 0.0
    %363 = vmatpush1.msra.mxu0 %v336
    %364 = vmatprep.subr.mxu0 0.0
    %365 = vmatpush1.msra.mxu0 %v337
    %366 = vmatprep.subr.mxu0 0.0
    %367 = vmatpush1.msra.mxu0 %v338
    %368 = vmatprep.subr.mxu0 0.0
    %369 = vmatpush1.msra.mxu0 %v339
    %370 = vmatprep.subr.mxu0 0.0
    %371 = vmatpush1.msra.mxu0 %v340
    %372 = vmatprep.subr.mxu0 0.0
    %373 = vmatpush1.msra.mxu0 %v341
    %374 = vmatprep.subr.mxu0 0.0
    %375 = vmatpush1.msra.mxu0 %v342
    %376 = vmatprep.subr.mxu0 0.0
    %377 = vmatpush1.msra.mxu0 %v343
    %378 = vmatprep.subr.mxu0 0.0
    %379 = vmatpush1.msra.mxu0 %v344
    %380 = vmatprep.subr.mxu0 0.0
    %381 = vmatpush1.msra.mxu0 %v345
    %382 = vmatprep.subr.mxu0 0.0
    %383 = vmatpush1.msra.mxu0 %v346
    %384 = vmatprep.subr.mxu0 0.0
    %385 = vmatpush1.msra.mxu0 %v347
    %386 = vmatprep.subr.mxu0 0.0
    %387 = vmatpush1.msra.mxu0 %v348
    %388 = vmatprep.subr.mxu0 0.0
    %389 = vmatpush1.msra.mxu0 0.0
    %390 = vmatprep.subr.mxu0 0.0
    %391 = vmatpush1.msra.mxu0 0.0
    %392 = vmatprep.subr.mxu0 0.0
    %393 = vmatpush1.msra.mxu0 0.0
    %394 = vmatprep.subr.mxu0 0.0
    %395 = vmatpush1.msra.mxu0 0.0
    %396 = vmatprep.subr.mxu0 0.0
    %397 = vmatpush1.msra.mxu0 0.0
    %398 = vmatprep.subr.mxu0 0.0
    %399 = vmatpush1.msra.mxu0 0.0
    %400 = vmatprep.subr.mxu0 0.0
    %401 = vmatpush1.msra.mxu0 0.0
    %402 = vmatprep.subr.mxu0 0.0
    %403 = vmatpush1.msra.mxu0 0.0
    %404 = vmatprep.subr.mxu0 0.0
    %405 = vmatpush1.msra.mxu0 0.0
    %406 = vmatprep.subr.mxu0 0.0
    %407 = vmatpush1.msra.mxu0 0.0
    %408 = vmatprep.subr.mxu0 0.0
    %409 = vmatpush1.msra.mxu0 0.0
    %410 = vmatprep.subr.mxu0 0.0
    %411 = vmatpush1.msra.mxu0 0.0
    %412 = vmatprep.subr.mxu0 0.0
    %413 = vmatpush1.msra.mxu0 0.0
    %414 = vmatprep.subr.mxu0 0.0
    %415 = vmatpush1.msra.mxu0 0.0
    %416 = vmatprep.subr.mxu0 0.0
    %417 = vmatpush1.msra.mxu0 0.0
    %418 = vmatprep.subr.mxu0 0.0
    %419 = vmatpush1.msra.mxu0 0.0
    %420 = vmatprep.mubr.f32.mxu0 0.0
    %421 = vmatmul.mubr.f32.gmra.mrb[0].mxu0 %v332
    %v422 = vpop.f32.mrb[0].mxu0
    %v423 = vadd.f32 %v354, %v422
    %v424 = vpop.f32.mrb[0].mxu0
    %425 = vdwg.mxu0
    %426 = vmax.xlane.f32.xlu0 %v423
    %v427 = vpop.xlane.xlu0 %426
    %v428 = vsub.f32 %v423, %v427
    %v429 = vmul.f32 %v428, 1.442695
    %v430 = vpow.pop %v429
    %431 = vadd.xlane.f32.xlu0 %v430
    %v432 = vpop.xlane.xlu0 %431
    %v433 = vlog2.pop %v432
    %v434 = vmul.f32 %v433, 0.6931472
    %v435 = vsub.f32 %v428, %v434
    %436 = vst [vmem:[#allocation10] sm:$0xff] %v435
    // Predicated region
    $region42: #{tpu_custom_call.1} parent=1 // pred_check
      _
    $region43: #{tpu_custom_call.1} parent=1 // pred_check_branch
      %438 = sbr.rel (0) target = $region45
    $region44: #{tpu_custom_call.1} parent=1 // pred_region
      %s440 = ssub.s32 128, 128
      %441 = vsyncadd [#allocation4], %s440
      %s443 = sshll.u32 [#allocation10], 4
      %s444 = int_to_ptr.vmem [resolvable:$true] %s443
      %446 = dma.vmem_to_hbm [thread:$0]  %s444, 128, %s6, [#allocation4]
    $region45: #{tpu_custom_call.1} parent=1 // pred_fallthru
      _
    // Predicated region
    $region46: #{tpu_custom_call.1} parent=1 // pred_check
      _
    $region47: #{tpu_custom_call.1} parent=1 // pred_check_branch
      %448 = sbr.rel (0) target = $region49
    $region48: #{tpu_custom_call.1} parent=1 // pred_region
      %449 = dma.done [#allocation4], 128
    $region49: #{tpu_custom_call.1} parent=1 // pred_fallthru
      _
    %450 = vsyncpa [#allocation3], 1
    %451 = vsyncpa [#allocation6], 1
    %452 = vsyncpa [#allocation9], 1
    %453 = vsyncpa [#allocation4], 1

</llo_original>
